<compile_context>
chip_gen: v7x
topology: tpu7x:2x2x1
jax: 0.10.0
libtpu: 0.0.40
codegen_flags: <defaults>
</compile_context>

<pallas_src>
import functools

import jax
import jax.numpy as jnp
from jax.experimental import pallas as pl
from jax.experimental.pallas import tpu as pltpu


def _dice_partial_kernel(logits_ref, target_ref, inter_ref, card_ref, *, num_classes):
    # logits_ref: [1, C, TH, L]  (native dtype, cast to f32 in-register)
    # target_ref: [1, TH, L]     int32 class ids
    # inter_ref / card_ref: [1, C, L] f32 per-batch accumulators (output blocks,
    #   resident in VMEM across the H-tile grid axis).
    t = pl.program_id(1)

    @pl.when(t == 0)
    def _init():
        inter_ref[...] = jnp.zeros_like(inter_ref)
        card_ref[...] = jnp.zeros_like(card_ref)

    logits = logits_ref[0].astype(jnp.float32)       # [C, TH, L]
    target = target_ref[0]                           # [TH, L] int32

    # Per-pixel softmax over the class axis: one exp pass + one reciprocal.
    m = jnp.max(logits, axis=0, keepdims=True)       # [1, TH, L]
    e = jnp.exp(logits - m)                          # [C, TH, L]
    s = jnp.sum(e, axis=0, keepdims=True)            # [1, TH, L]
    inv_s = pl.reciprocal(s, approx=False)[0]        # [TH, L]

    inter_rows = []
    card_rows = []
    for c in range(num_classes):                     # small unrolled class loop, no one-hot tensor
        p_c = e[c] * inv_s                                             # [TH, L] softmax prob
        m_c = (target == c).astype(jnp.float32)                        # [TH, L] one-hot slice
        inter_rows.append(jnp.sum(p_c * m_c, axis=0, keepdims=True))   # [1, L]
        card_rows.append(jnp.sum(p_c + m_c, axis=0, keepdims=True))    # [1, L]

    inter_ref[0] += jnp.concatenate(inter_rows, axis=0)                # [C, L]
    card_ref[0] += jnp.concatenate(card_rows, axis=0)                  # [C, L]


def _lane_fold_factor(H, W):
    """Smallest f dividing H with (f * W) % 128 == 0 (lane-dense blocks); 1 if none."""
    if W % 128 == 0:
        return 1
    for f in range(1, H + 1):
        if H % f == 0 and (f * W) % 128 == 0:
            return f
    return 1


def _choose_tile_h(hf, c, lanes, itemsize, budget_bytes=16 * 1024 * 1024):
    """Largest divisor of hf obeying the (8,128) block rule whose working set fits the budget."""
    valid = [d for d in range(1, hf + 1) if hf % d == 0 and (d % 8 == 0 or d == hf)]
    valid.sort(reverse=True)
    for d in valid:
        # 2x double-buffered input block + ~2 full-size f32 temporaries inside the kernel
        if c * d * lanes * (2 * itemsize + 8) <= budget_bytes:
            return d
    return valid[-1]


@jax.jit
def dice_log_cosh(pred, target, eps=1e-7):
    """pred: [B, C, H, W] logits (any float dtype); target: [B, H, W] or [B, 1, H, W] ints."""
    B, C, H, W = pred.shape
    reduce_w = target.ndim == 4                      # dims = (0,2,3) vs (0,2) in dice_loss
    tgt = target.reshape(B, H, W).astype(jnp.int32)

    if C == 1:
        # Binary sigmoid branch: probas = [sigmoid(x), 1-sigmoid(x)], one-hot ordered [cls1, cls0]
        # == 2-class softmax on logits [x, 0] with the target relabeled 1 - t.
        pred = jnp.concatenate([pred, jnp.zeros_like(pred)], axis=1)
        tgt = 1 - tgt
        C = 2

    fold = _lane_fold_factor(H, W)
    hf, lanes = H // fold, fold * W
    x = pred.reshape(B, C, hf, lanes)                # contiguous reshape only: no transpose, no upcast
    tg = tgt.reshape(B, hf, lanes)

    th = _choose_tile_h(hf, C, lanes, jnp.dtype(pred.dtype).itemsize)
    grid = (B, hf // th)

    kernel = functools.partial(_dice_partial_kernel, num_classes=C)
    inter, card = pl.pallas_call(
        kernel,
        out_shape=(
            jax.ShapeDtypeStruct((B, C, lanes), jnp.float32),
            jax.ShapeDtypeStruct((B, C, lanes), jnp.float32),
        ),
        grid=grid,
        in_specs=[
            pl.BlockSpec((1, C, th, lanes), lambda b, t: (b, 0, t, 0)),
            pl.BlockSpec((1, th, lanes), lambda b, t: (b, t, 0)),
        ],
        out_specs=(
            pl.BlockSpec((1, C, lanes), lambda b, t: (b, 0, 0)),
            pl.BlockSpec((1, C, lanes), lambda b, t: (b, 0, 0)),
        ),
        compiler_params=pltpu.CompilerParams(
            dimension_semantics=("parallel", "arbitrary"),
            vmem_limit_bytes=48 * 1024 * 1024,
        ),
    )(x, tg)

    # Tiny finalization on [C, W]-sized data (negligible HBM traffic) in plain JAX.
    inter_cw = inter.sum(axis=0).reshape(C, fold, W).sum(axis=1)    # [C, W]
    card_cw = card.sum(axis=0).reshape(C, fold, W).sum(axis=1)      # [C, W]
    if reduce_w:
        inter_r, card_r = inter_cw.sum(axis=1), card_cw.sum(axis=1)  # [C]
    else:
        inter_r, card_r = inter_cw, card_cw                          # [C, W]
    dice = jnp.mean(2.0 * inter_r / (card_r + eps))
    return jnp.log(jnp.cosh(1.0 - dice))


def _reference(pred, target, eps=1e-7):
    """Pure-JAX re-implementation of DiceLogCosh.forward (verification only)."""
    num_classes = pred.shape[1]
    true = target
    t_sq = true[:, 0] if (true.ndim == 4 and true.shape[1] == 1) else true  # torch .squeeze(1)
    if num_classes == 1:
        oh = jnp.moveaxis(jax.nn.one_hot(t_sq, 2, dtype=jnp.float32), -1, 1)  # [B, 2, H, W]
        true_1_hot = jnp.concatenate([oh[:, 1:2], oh[:, 0:1]], axis=1)
        pos = jax.nn.sigmoid(pred.astype(jnp.float32))
        probas = jnp.concatenate([pos, 1.0 - pos], axis=1)
    else:
        true_1_hot = jnp.moveaxis(jax.nn.one_hot(t_sq, num_classes, dtype=jnp.float32), -1, 1)
        probas = jax.nn.softmax(pred.astype(jnp.float32), axis=1)
    dims = (0,) + tuple(range(2, true.ndim))
    inter = jnp.sum(probas * true_1_hot, axis=dims)
    card = jnp.sum(probas + true_1_hot, axis=dims)
    dice = jnp.mean(2.0 * inter / (card + eps))
    return jnp.log(jnp.cosh(1.0 - dice))


if __name__ == "__main__":
    B, C, H, W = 2, 4, 16, 16
    key = jax.random.PRNGKey(0)
    k_pred, k_tgt, k_pred1, k_tgt1 = jax.random.split(key, 4)
    pred = jax.random.normal(k_pred, (B, C, H, W), dtype=jnp.float32)
    target = jax.random.randint(k_tgt, (B, H, W), 0, C, dtype=jnp.int32)

    # multiclass, 3-D target  (dims = (0, 2) in the reference dice_loss)
    out = jax.block_until_ready(dice_log_cosh(pred, target))
    ref = jax.block_until_ready(_reference(pred, target))
    assert jnp.allclose(out, ref, rtol=1e-5, atol=1e-5), (out, ref)

    # multiclass, 4-D [B, 1, H, W] target  (dims = (0, 2, 3))
    out4 = jax.block_until_ready(dice_log_cosh(pred, target[:, None]))
    ref4 = jax.block_until_ready(_reference(pred, target[:, None]))
    assert jnp.allclose(out4, ref4, rtol=1e-5, atol=1e-5), (out4, ref4)

    # binary (num_classes == 1) sigmoid branch
    pred_b = jax.random.normal(k_pred1, (B, 1, H, W), dtype=jnp.float32)
    target_b = jax.random.randint(k_tgt1, (B, H, W), 0, 2, dtype=jnp.int32)
    out_b = jax.block_until_ready(dice_log_cosh(pred_b, target_b))
    ref_b = jax.block_until_ready(_reference(pred_b, target_b))
    assert jnp.allclose(out_b, ref_b, rtol=1e-5, atol=1e-5), (out_b, ref_b)

    print("KERNEL_OK")
</pallas_src>

<mosaic_0001>
module attributes {stable_mosaic.version = 11 : i64} {
  func.func @_dice_partial_kernel(%arg0: i32, %arg1: i32, %arg2: memref<1x4x2x128xf32, #tpu.memory_space<vmem>>, %arg3: memref<1x2x128xi32, #tpu.memory_space<vmem>>, %arg4: memref<1x4x128xf32, #tpu.memory_space<vmem>>, %arg5: memref<1x4x128xf32, #tpu.memory_space<vmem>>) attributes {dimension_semantics = [#tpu.dimension_semantics<parallel>, #tpu.dimension_semantics<arbitrary>], iteration_bounds = array<i64: 2, 1>, scalar_prefetch = 0 : i64, scratch_operands = 0 : i64, tpu.core_type = #tpu.core_type<tc>, window_params = [{transform_indices = @transform_0, window_bounds = array<i64: 1, 4, 2, 128>}, {transform_indices = @transform_1, window_bounds = array<i64: 1, 2, 128>}, {transform_indices = @transform_2, window_bounds = array<i64: 1, 4, 128>}, {transform_indices = @transform_3, window_bounds = array<i64: 1, 4, 128>}]} {
    %c0_i32 = arith.constant 0 : i32
    %0 = arith.cmpi eq, %arg1, %c0_i32 : i32
    %1 = arith.extui %0 : i1 to i32
    %c0_i32_0 = arith.constant 0 : i32
    %2 = arith.cmpi ne, %1, %c0_i32_0 : i32
    scf.if %2 {
      %cst_29 = arith.constant 0.000000e+00 : f32
      %82 = vector.broadcast %cst_29 : f32 to vector<1x4x128xf32>
      %c0_30 = arith.constant 0 : index
      %c0_31 = arith.constant 0 : index
      %c0_32 = arith.constant 0 : index
      %83 = vector.load %arg4[%c0_30, %c0_31, %c0_32] : memref<1x4x128xf32, #tpu.memory_space<vmem>>, vector<1x4x128xf32>
      tpu.vector_store %arg4[%c0_30, %c0_31, %c0_32], %82 {strides = array<i32>} : memref<1x4x128xf32, #tpu.memory_space<vmem>>, vector<1x4x128xf32>,
      %cst_33 = arith.constant 0.000000e+00 : f32
      %84 = vector.broadcast %cst_33 : f32 to vector<1x4x128xf32>
      %c0_34 = arith.constant 0 : index
      %c0_35 = arith.constant 0 : index
      %c0_36 = arith.constant 0 : index
      %85 = vector.load %arg5[%c0_34, %c0_35, %c0_36] : memref<1x4x128xf32, #tpu.memory_space<vmem>>, vector<1x4x128xf32>
      tpu.vector_store %arg5[%c0_34, %c0_35, %c0_36], %84 {strides = array<i32>} : memref<1x4x128xf32, #tpu.memory_space<vmem>>, vector<1x4x128xf32>,
    } else {
    }
    %c0 = arith.constant 0 : index
    %c0_1 = arith.constant 0 : index
    %c0_2 = arith.constant 0 : index
    %c0_3 = arith.constant 0 : index
    %3 = vector.load %arg2[%c0, %c0_1, %c0_2, %c0_3] : memref<1x4x2x128xf32, #tpu.memory_space<vmem>>, vector<1x4x2x128xf32>
    %4 = vector.shape_cast %3 : vector<1x4x2x128xf32> to vector<4x2x128xf32>
    %c0_4 = arith.constant 0 : index
    %c0_5 = arith.constant 0 : index
    %c0_6 = arith.constant 0 : index
    %5 = vector.load %arg3[%c0_4, %c0_5, %c0_6] : memref<1x2x128xi32, #tpu.memory_space<vmem>>, vector<1x2x128xi32>
    %6 = vector.shape_cast %5 : vector<1x2x128xi32> to vector<2x128xi32>
    %cst = arith.constant dense<0xFF800000> : vector<2x128xf32>
    %7 = vector.multi_reduction <maximumf>, %4, %cst [0] : vector<4x2x128xf32> to vector<2x128xf32>
    %8 = vector.shape_cast %7 : vector<2x128xf32> to vector<1x2x128xf32>
    %9 = vector.broadcast %8 : vector<1x2x128xf32> to vector<4x2x128xf32>
    %10 = arith.subf %4, %9 : vector<4x2x128xf32>
    %11 = math.exp %10 : vector<4x2x128xf32>
    %cst_7 = arith.constant dense<0.000000e+00> : vector<2x128xf32>
    %12 = vector.multi_reduction <add>, %11, %cst_7 [0] : vector<4x2x128xf32> to vector<2x128xf32>
    %13 = vector.shape_cast %12 : vector<2x128xf32> to vector<1x2x128xf32>
    %14 = tpu.reciprocal %13 : vector<1x2x128xf32> -> vector<1x2x128xf32>
    %15 = vector.shape_cast %14 : vector<1x2x128xf32> to vector<2x128xf32>
    %16 = vector.extract_strided_slice %11 {offsets = [0, 0, 0], sizes = [1, 2, 128], strides = [1, 1, 1]} : vector<4x2x128xf32> to vector<1x2x128xf32>
    %17 = vector.shape_cast %16 : vector<1x2x128xf32> to vector<2x128xf32>
    %18 = arith.mulf %17, %15 : vector<2x128xf32>
    %c0_i32_8 = arith.constant 0 : i32
    %19 = vector.broadcast %c0_i32_8 : i32 to vector<2x128xi32>
    %20 = arith.cmpi eq, %6, %19 : vector<2x128xi32>
    %21 = arith.extui %20 : vector<2x128xi1> to vector<2x128xi32>
    %22 = arith.sitofp %21 : vector<2x128xi32> to vector<2x128xf32>
    %23 = arith.mulf %18, %22 : vector<2x128xf32>
    %cst_9 = arith.constant dense<0.000000e+00> : vector<128xf32>
    %24 = vector.multi_reduction <add>, %23, %cst_9 [0] : vector<2x128xf32> to vector<128xf32>
    %25 = vector.shape_cast %24 : vector<128xf32> to vector<1x128xf32>
    %26 = arith.addf %18, %22 : vector<2x128xf32>
    %cst_10 = arith.constant dense<0.000000e+00> : vector<128xf32>
    %27 = vector.multi_reduction <add>, %26, %cst_10 [0] : vector<2x128xf32> to vector<128xf32>
    %28 = vector.shape_cast %27 : vector<128xf32> to vector<1x128xf32>
    %29 = vector.extract_strided_slice %11 {offsets = [1, 0, 0], sizes = [1, 2, 128], strides = [1, 1, 1]} : vector<4x2x128xf32> to vector<1x2x128xf32>
    %30 = vector.shape_cast %29 : vector<1x2x128xf32> to vector<2x128xf32>
    %31 = arith.mulf %30, %15 : vector<2x128xf32>
    %c1_i32 = arith.constant 1 : i32
    %32 = vector.broadcast %c1_i32 : i32 to vector<2x128xi32>
    %33 = arith.cmpi eq, %6, %32 : vector<2x128xi32>
    %34 = arith.extui %33 : vector<2x128xi1> to vector<2x128xi32>
    %35 = arith.sitofp %34 : vector<2x128xi32> to vector<2x128xf32>
    %36 = arith.mulf %31, %35 : vector<2x128xf32>
    %cst_11 = arith.constant dense<0.000000e+00> : vector<128xf32>
    %37 = vector.multi_reduction <add>, %36, %cst_11 [0] : vector<2x128xf32> to vector<128xf32>
    %38 = vector.shape_cast %37 : vector<128xf32> to vector<1x128xf32>
    %39 = arith.addf %31, %35 : vector<2x128xf32>
    %cst_12 = arith.constant dense<0.000000e+00> : vector<128xf32>
    %40 = vector.multi_reduction <add>, %39, %cst_12 [0] : vector<2x128xf32> to vector<128xf32>
    %41 = vector.shape_cast %40 : vector<128xf32> to vector<1x128xf32>
    %42 = vector.extract_strided_slice %11 {offsets = [2, 0, 0], sizes = [1, 2, 128], strides = [1, 1, 1]} : vector<4x2x128xf32> to vector<1x2x128xf32>
    %43 = vector.shape_cast %42 : vector<1x2x128xf32> to vector<2x128xf32>
    %44 = arith.mulf %43, %15 : vector<2x128xf32>
    %c2_i32 = arith.constant 2 : i32
    %45 = vector.broadcast %c2_i32 : i32 to vector<2x128xi32>
    %46 = arith.cmpi eq, %6, %45 : vector<2x128xi32>
    %47 = arith.extui %46 : vector<2x128xi1> to vector<2x128xi32>
    %48 = arith.sitofp %47 : vector<2x128xi32> to vector<2x128xf32>
    %49 = arith.mulf %44, %48 : vector<2x128xf32>
    %cst_13 = arith.constant dense<0.000000e+00> : vector<128xf32>
    %50 = vector.multi_reduction <add>, %49, %cst_13 [0] : vector<2x128xf32> to vector<128xf32>
    %51 = vector.shape_cast %50 : vector<128xf32> to vector<1x128xf32>
    %52 = arith.addf %44, %48 : vector<2x128xf32>
    %cst_14 = arith.constant dense<0.000000e+00> : vector<128xf32>
    %53 = vector.multi_reduction <add>, %52, %cst_14 [0] : vector<2x128xf32> to vector<128xf32>
    %54 = vector.shape_cast %53 : vector<128xf32> to vector<1x128xf32>
    %55 = vector.extract_strided_slice %11 {offsets = [3, 0, 0], sizes = [1, 2, 128], strides = [1, 1, 1]} : vector<4x2x128xf32> to vector<1x2x128xf32>
    %56 = vector.shape_cast %55 : vector<1x2x128xf32> to vector<2x128xf32>
    %57 = arith.mulf %56, %15 : vector<2x128xf32>
    %c3_i32 = arith.constant 3 : i32
    %58 = vector.broadcast %c3_i32 : i32 to vector<2x128xi32>
    %59 = arith.cmpi eq, %6, %58 : vector<2x128xi32>
    %60 = arith.extui %59 : vector<2x128xi1> to vector<2x128xi32>
    %61 = arith.sitofp %60 : vector<2x128xi32> to vector<2x128xf32>
    %62 = arith.mulf %57, %61 : vector<2x128xf32>
    %cst_15 = arith.constant dense<0.000000e+00> : vector<128xf32>
    %63 = vector.multi_reduction <add>, %62, %cst_15 [0] : vector<2x128xf32> to vector<128xf32>
    %64 = vector.shape_cast %63 : vector<128xf32> to vector<1x128xf32>
    %65 = arith.addf %57, %61 : vector<2x128xf32>
    %cst_16 = arith.constant dense<0.000000e+00> : vector<128xf32>
    %66 = vector.multi_reduction <add>, %65, %cst_16 [0] : vector<2x128xf32> to vector<128xf32>
    %67 = vector.shape_cast %66 : vector<128xf32> to vector<1x128xf32>
    %c0_17 = arith.constant 0 : index
    %c0_18 = arith.constant 0 : index
    %c0_19 = arith.constant 0 : index
    %68 = vector.load %arg4[%c0_17, %c0_18, %c0_19] : memref<1x4x128xf32, #tpu.memory_space<vmem>>, vector<1x4x128xf32>
    %69 = vector.shape_cast %68 : vector<1x4x128xf32> to vector<4x128xf32>
    %70 = tpu.concatenate %25, %38, %51, %64 in 0 : vector<1x128xf32>, vector<1x128xf32>, vector<1x128xf32>, vector<1x128xf32> -> vector<4x128xf32>
    %71 = arith.addf %69, %70 : vector<4x128xf32>
    %c0_20 = arith.constant 0 : index
    %c0_21 = arith.constant 0 : index
    %c0_22 = arith.constant 0 : index
    %72 = vector.load %arg4[%c0_20, %c0_21, %c0_22] : memref<1x4x128xf32, #tpu.memory_space<vmem>>, vector<1x4x128xf32>
    %73 = vector.shape_cast %72 : vector<1x4x128xf32> to vector<4x128xf32>
    %74 = vector.shape_cast %71 : vector<4x128xf32> to vector<1x4x128xf32>
    tpu.vector_store %arg4[%c0_20, %c0_21, %c0_22], %74 {strides = array<i32>} : memref<1x4x128xf32, #tpu.memory_space<vmem>>, vector<1x4x128xf32>,
    %c0_23 = arith.constant 0 : index
    %c0_24 = arith.constant 0 : index
    %c0_25 = arith.constant 0 : index
    %75 = vector.load %arg5[%c0_23, %c0_24, %c0_25] : memref<1x4x128xf32, #tpu.memory_space<vmem>>, vector<1x4x128xf32>
    %76 = vector.shape_cast %75 : vector<1x4x128xf32> to vector<4x128xf32>
    %77 = tpu.concatenate %28, %41, %54, %67 in 0 : vector<1x128xf32>, vector<1x128xf32>, vector<1x128xf32>, vector<1x128xf32> -> vector<4x128xf32>
    %78 = arith.addf %76, %77 : vector<4x128xf32>
    %c0_26 = arith.constant 0 : index
    %c0_27 = arith.constant 0 : index
    %c0_28 = arith.constant 0 : index
    %79 = vector.load %arg5[%c0_26, %c0_27, %c0_28] : memref<1x4x128xf32, #tpu.memory_space<vmem>>, vector<1x4x128xf32>
    %80 = vector.shape_cast %79 : vector<1x4x128xf32> to vector<4x128xf32>
    %81 = vector.shape_cast %78 : vector<4x128xf32> to vector<1x4x128xf32>
    tpu.vector_store %arg5[%c0_26, %c0_27, %c0_28], %81 {strides = array<i32>} : memref<1x4x128xf32, #tpu.memory_space<vmem>>, vector<1x4x128xf32>,
    return
  }
  func.func @transform_0(%arg0: i32, %arg1: i32) -> (i32, i32, i32, i32) {
    %c0_i32 = arith.constant 0 : i32
    %c0_i32_0 = arith.constant 0 : i32
    %c0_i32_1 = arith.constant 0 : i32
    return %arg0, %c0_i32, %arg1, %c0_i32_0 : i32, i32, i32, i32
  }
  func.func @transform_1(%arg0: i32, %arg1: i32) -> (i32, i32, i32) {
    %c0_i32 = arith.constant 0 : i32
    %c0_i32_0 = arith.constant 0 : i32
    return %arg0, %arg1, %c0_i32 : i32, i32, i32
  }
  func.func @transform_2(%arg0: i32, %arg1: i32) -> (i32, i32, i32) {
    %c0_i32 = arith.constant 0 : i32
    %c0_i32_0 = arith.constant 0 : i32
    %c0_i32_1 = arith.constant 0 : i32
    return %arg0, %c0_i32, %c0_i32_0 : i32, i32, i32
  }
  func.func @transform_3(%arg0: i32, %arg1: i32) -> (i32, i32, i32) {
    %c0_i32 = arith.constant 0 : i32
    %c0_i32_0 = arith.constant 0 : i32
    %c0_i32_1 = arith.constant 0 : i32
    return %arg0, %c0_i32, %c0_i32_0 : i32, i32, i32
  }
}

</mosaic_0001>

<llo_original>
// kernel: dice_log_cosh.1
$region0: #{dice_log_cosh.1}
  #allocation0 [shape = 'u32[]', space=smem, size = 0x4, offset = 0x4, fixed_abs, tag = 'smem constant byte address 0x4 - core index']
  #allocation1 [shape = 'u32[144,128]{1,0:T(1,128)}', space=vmem, size = 0x12000, scoped, tag = 'internal scratch']
  %s0 = inlined_call_operand.vmem [shape: f32[2,4,2,128], index: 0, kind: input, shape index: {}]
  %s1 = inlined_call_operand.vmem [shape: s32[2,2,128], index: 1, kind: input, shape index: {}]
  %s2 = inlined_call_operand.vmem [shape: f32[2,4,128], index: 2, kind: output, shape index: {0}]
  %s3 = inlined_call_operand.vmem [shape: f32[2,4,128], index: 3, kind: output, shape index: {1}]
  %4 = xla_tuple %s2, %s3
  %s5 = sld [smem:[#allocation0]]
  $region53: #{dice_log_cosh.1} parent=0
    _
  %s7 = ssub.s32 1, %s5
  %s8 = scalar_select 0, %s7, %s5
  loop: start=0, step=1, limit=4
  $region2: #{dice_log_cosh.1} parent=0 // loop_pre_header
    _
  $region3: #{dice_log_cosh.1} parent=0 // loop_header
    %s10 = sphi 0, %s14
    %p11 = scmp.ge.s32.totalorder %s10, 4
    %s17 = sphi 0, %s29
    %s18 = sphi 0, %s25
    %s19 = sphi 0, %s17
    %s20 = sphi 0, %s18
    %s21 = sphi 0, %s19
    %s22 = sphi 0, %s20
    %s34 = sphi 0, %s36
    %s37 = sphi 0, %s34
    %s38 = sphi 0, %s37
    %s54 = sphi 0, %s38
    %s62 = sphi 0, %s64
    %s65 = sphi 0, %s62
    %s66 = sphi 0, %s65
    %s82 = sphi 0, %s66
    %s88 = sphi 0, %s90
    %s91 = sphi 0, %s88
    %s92 = sphi 0, %s91
    %s108 = sphi 0, %s92
    %s114 = sphi 0, %s116
    %s117 = sphi 0, %s114
    %s118 = sphi 0, %s117
    %s134 = sphi 0, %s118
  $region4: #{dice_log_cosh.1} parent=0 // loop_header_branch
    %13 = sbr.rel (%p11) target = $region8
  $region5: #{dice_log_cosh.1} parent=0 // loop_body
    %s15 = ssub.s32 %s10, 1
    %s16 = ssub.s32 %s10, 2
    %s23 = sadd.s32 1, %s18
    %p24 = scmp.ge.s32.totalorder %s23, 1
    %s25 = scalar_select %p24, 0, %s23
    %s26 = sadd.s32 1, %s17
    %s27 = scalar_select %p24, %s26, %s17
    %p28 = scmp.ge.s32.totalorder %s27, 2
    %s29 = scalar_select %p28, 0, %s27
    %s30 = ssub.s32 %s17, %s29
    %s31 = ssub.s32 %s18, %s25
    %s32 = sor.u32 %s30, %s31
    %p33 = scmp.eq.s32.totalorder %s32, 0
    %s35 = sadd.s32 %s34, 1
    %s36 = scalar_select %p33, %s34, %s35
    %p39 = pneg %p33
    %p40 = scmp.eq.s32.totalorder %s10, 1
    %p41 = por %p39, %p40
    %p42 = scmp.ne.s32.totalorder %s34, %s37
    %p43 = scmp.eq.s32.totalorder %s10, 0
    %p44 = por %p42, %p43
    %p45 = scmp.ne.s32.totalorder %s34, %s37
    %p46 = scmp.eq.s32.totalorder %s15, 1
    %p47 = por %p45, %p46
    %p48 = scmp.ne.s32.totalorder %s37, %s38
    %p49 = scmp.eq.s32.totalorder %s15, 0
    %p50 = por %p48, %p49
    %p51 = scmp.ne.s32.totalorder %s37, %s38
    %p52 = scmp.eq.s32.totalorder %s16, 1
    %p53 = por %p51, %p52
    %p55 = scmp.ne.s32.totalorder %s38, %s54
    %p56 = scmp.eq.s32.totalorder %s16, 0
    %p57 = por %p55, %p56
    %s58 = ssub.s32 %s17, %s29
    %s59 = ssub.s32 %s18, %s25
    %s60 = sor.u32 %s58, %s59
    %p61 = scmp.eq.s32.totalorder %s60, 0
    %s63 = sadd.s32 %s62, 1
    %s64 = scalar_select %p61, %s62, %s63
    %p67 = pneg %p61
    %p68 = scmp.eq.s32.totalorder %s10, 1
    %p69 = por %p67, %p68
    %p70 = scmp.ne.s32.totalorder %s62, %s65
    %p71 = scmp.eq.s32.totalorder %s10, 0
    %p72 = por %p70, %p71
    %p73 = scmp.ne.s32.totalorder %s62, %s65
    %p74 = scmp.eq.s32.totalorder %s15, 1
    %p75 = por %p73, %p74
    %p76 = scmp.ne.s32.totalorder %s65, %s66
    %p77 = scmp.eq.s32.totalorder %s15, 0
    %p78 = por %p76, %p77
    %p79 = scmp.ne.s32.totalorder %s65, %s66
    %p80 = scmp.eq.s32.totalorder %s16, 1
    %p81 = por %p79, %p80
    %p83 = scmp.ne.s32.totalorder %s66, %s82
    %p84 = scmp.eq.s32.totalorder %s16, 0
    %p85 = por %p83, %p84
    %s86 = ssub.s32 %s17, %s29
    %p87 = scmp.eq.s32.totalorder %s86, 0
    %s89 = sadd.s32 %s88, 1
    %s90 = scalar_select %p87, %s88, %s89
    %p93 = pneg %p87
    %p94 = scmp.eq.s32.totalorder %s10, 1
    %p95 = por %p93, %p94
    %p96 = scmp.ne.s32.totalorder %s88, %s91
    %p97 = scmp.eq.s32.totalorder %s10, 0
    %p98 = por %p96, %p97
    %p99 = scmp.ne.s32.totalorder %s88, %s91
    %p100 = scmp.eq.s32.totalorder %s15, 1
    %p101 = por %p99, %p100
    %p102 = scmp.ne.s32.totalorder %s91, %s92
    %p103 = scmp.eq.s32.totalorder %s15, 0
    %p104 = por %p102, %p103
    %p105 = scmp.ne.s32.totalorder %s91, %s92
    %p106 = scmp.eq.s32.totalorder %s16, 1
    %p107 = por %p105, %p106
    %p109 = scmp.ne.s32.totalorder %s92, %s108
    %p110 = scmp.eq.s32.totalorder %s16, 0
    %p111 = por %p109, %p110
    %s112 = ssub.s32 %s17, %s29
    %p113 = scmp.eq.s32.totalorder %s112, 0
    %s115 = sadd.s32 %s114, 1
    %s116 = scalar_select %p113, %s114, %s115
    %p119 = pneg %p113
    %p120 = scmp.eq.s32.totalorder %s10, 1
    %p121 = por %p119, %p120
    %p122 = scmp.ne.s32.totalorder %s114, %s117
    %p123 = scmp.eq.s32.totalorder %s10, 0
    %p124 = por %p122, %p123
    %p125 = scmp.ne.s32.totalorder %s114, %s117
    %p126 = scmp.eq.s32.totalorder %s15, 1
    %p127 = por %p125, %p126
    %p128 = scmp.ne.s32.totalorder %s117, %s118
    %p129 = scmp.eq.s32.totalorder %s15, 0
    %p130 = por %p128, %p129
    %p131 = scmp.ne.s32.totalorder %s117, %s118
    %p132 = scmp.eq.s32.totalorder %s16, 1
    %p133 = por %p131, %p132
    %p135 = scmp.ne.s32.totalorder %s118, %s134
    %p136 = scmp.eq.s32.totalorder %s16, 0
    %p137 = por %p135, %p136
    %p138 = scmp.le.s32.totalorder 1, %s10
    %p139 = scmp.lt.s32.totalorder %s10, 3
    %p140 = pnand %p138, %p139
    %p141 = pneg %p140
    // Predicated region
    $region9: #{dice_log_cosh.1} parent=5 // pred_check
      _
    $region10: #{dice_log_cosh.1} parent=5 // pred_check_branch
      %143 = sbr.rel (%p140) target = $region12
    $region11: #{dice_log_cosh.1} parent=5 // pred_region
      %s144 = ssub.s32 %s10, 1
    $region12: #{dice_log_cosh.1} parent=5 // pred_fallthru
      _
    %p145 = scmp.lt.s32.totalorder %s10, 2
    // Predicated region
    $region13: #{dice_log_cosh.1} parent=5 // pred_check
      %p146 = pneg %p145
    $region14: #{dice_log_cosh.1} parent=5 // pred_check_branch
      %148 = sbr.rel (%p146) target = $region16
    $region15: #{dice_log_cosh.1} parent=5 // pred_region
      // Predicated region
      $region17: #{dice_log_cosh.1} parent=15 // pred_check
        %p149 = pneg %p44
      $region18: #{dice_log_cosh.1} parent=15 // pred_check_branch
        %151 = sbr.rel (%p149) target = $region20
      $region19: #{dice_log_cosh.1} parent=15 // pred_region
        %p152 = scmp.lt.s32.totalorder %s17, 1
        %s153 = scalar_select %p152, %s17, 1
        %p154 = scmp.lt.s32.totalorder %s18, 0
        %s155 = scalar_select %p154, %s18, 0
        %s156 = smul.addr %s153, 4
        %s157 = sadd.s32 %s155, %s156
        %s158 = smul.addr %s157, 2
        %s159 = scalar_lea.vmem %s0, %s158
      $region20: #{dice_log_cosh.1} parent=15 // pred_fallthru
        _
      // Predicated region
      $region21: #{dice_log_cosh.1} parent=15 // pred_check
        %p160 = pneg %p72
      $region22: #{dice_log_cosh.1} parent=15 // pred_check_branch
        %162 = sbr.rel (%p160) target = $region24
      $region23: #{dice_log_cosh.1} parent=15 // pred_region
        %p163 = scmp.lt.s32.totalorder %s17, 1
        %s164 = scalar_select %p163, %s17, 1
        %p165 = scmp.lt.s32.totalorder %s18, 0
        %s166 = scalar_select %p165, %s18, 0
        %s167 = sadd.s32 %s166, %s164
        %s168 = smul.addr %s167, 2
        %s169 = scalar_lea.vmem %s1, %s168
      $region24: #{dice_log_cosh.1} parent=15 // pred_fallthru
        _
    $region16: #{dice_log_cosh.1} parent=5 // pred_fallthru
      _
    %p170 = scmp.le.s32.totalorder 1, %s10
    %p171 = scmp.lt.s32.totalorder %s10, 3
    %p172 = pnand %p170, %p171
    %p173 = pneg %p172
    // Predicated region
    $region25: #{dice_log_cosh.1} parent=5 // pred_check
      _
    $region26: #{dice_log_cosh.1} parent=5 // pred_check_branch
      %175 = sbr.rel (%p172) target = $region28
    $region27: #{dice_log_cosh.1} parent=5 // pred_region
      %s176 = ssub.s32 %s10, 1
      %p177 = scmp.lt.s32.totalorder %s19, 1
      %s178 = scalar_select %p177, %s19, 1
      %p179 = scmp.lt.s32.totalorder %s20, 0
      %s180 = scalar_select %p179, %s20, 0
      %s181 = smul.addr %s178, 4
      %s182 = sadd.s32 %s180, %s181
      %s183 = smul.addr %s182, 2
      %s184 = scalar_lea.vmem %s0, %s183
      %p185 = pneg %p50
      %p186 = pneg %p47
      %p187 = scmp.lt.s32.totalorder %s19, 1
      %s188 = scalar_select %p187, %s19, 1
      %p189 = scmp.lt.s32.totalorder %s20, 0
      %s190 = scalar_select %p189, %s20, 0
      %s191 = sadd.s32 %s190, %s188
      %s192 = smul.addr %s191, 2
      %s193 = scalar_lea.vmem %s1, %s192
      %p194 = pneg %p78
      %p195 = pneg %p75
      %p196 = pneg %p104
      %p197 = pneg %p101
      %p198 = scmp.lt.s32.totalorder %s19, 1
      %s199 = scalar_select %p198, %s19, 1
      %s200 = smul.addr %s199, 4
      %s201 = scalar_lea.vmem %s2, %s200
      %p202 = pneg %p130
      %p203 = pneg %p127
      %p204 = scmp.lt.s32.totalorder %s19, 1
      %s205 = scalar_select %p204, %s19, 1
      %s206 = smul.addr %s205, 4
      %s207 = scalar_lea.vmem %s3, %s206
      %p208 = scmp.lt.s32.totalorder %s19, 1
      %s209 = scalar_select %p208, %s19, 1
      %p210 = scmp.lt.s32.totalorder %s20, 0
      %s211 = scalar_select %p210, %s20, 0
      %s212 = smul.addr %s209, 4
      %s213 = sadd.s32 %s211, %s212
      %s214 = smul.addr %s213, 2
      %s215 = scalar_lea.vmem %s0, %s214
      %p216 = scmp.lt.s32.totalorder %s19, 1
      %s217 = scalar_select %p216, %s19, 1
      %p218 = scmp.lt.s32.totalorder %s20, 0
      %s219 = scalar_select %p218, %s20, 0
      %s220 = sadd.s32 %s219, %s217
      %s221 = smul.addr %s220, 2
      %s222 = scalar_lea.vmem %s1, %s221
      %p223 = scmp.lt.s32.totalorder %s19, 1
      %s224 = scalar_select %p223, %s19, 1
      %s225 = smul.addr %s224, 4
      %s226 = scalar_lea.vmem %s2, %s225
      %p227 = scmp.lt.s32.totalorder %s19, 1
      %s228 = scalar_select %p227, %s19, 1
      %s229 = smul.addr %s228, 4
      %s230 = scalar_lea.vmem %s3, %s229
      %p231 = scmp.eq.s32.totalorder %s20, 0
      // Predicated region
      $region29: #{dice_log_cosh.1} parent=27 // pred_check
        %p232 = pneg %p231
      $region30: #{dice_log_cosh.1} parent=27 // pred_check_branch
        %234 = sbr.rel (%p232) target = $region32
      $region31: #{dice_log_cosh.1} parent=27 // pred_region
        %235 = vst [vmem:[%s226] sm:$0xf] 0.0
        %236 = vst [vmem:[%s230] sm:$0xf] 0.0
      $region32: #{dice_log_cosh.1} parent=27 // pred_fallthru
        _
      %v237 = vld [vmem:[%s215] sm:$0x3]
      %v238 = vld [vmem:[%s215 + $0x2] sm:$0x3]
      %v239 = vld [vmem:[%s215 + $0x4] sm:$0x3]
      %v240 = vld [vmem:[%s215 + $0x6] sm:$0x3]
      %v241 = vld [vmem:[%s222] sm:$0x3]
      %vm242 = vcmask 1041408
      %v243 = vsel %vm242, %v237, -inf
      %v244 = vsel %vm242, %v238, -inf
      %v245 = vsel %vm242, %v239, -inf
      %v246 = vsel %vm242, %v240, -inf
      %v247 = vmax.f32 %v243, %v244
      %v248 = vmax.f32 %v245, %v246
      %v249 = vmax.f32 %v247, %v248
      %v250 = vsub.f32 %v237, %v249
      %v251 = vsub.f32 %v238, %v249
      %v252 = vsub.f32 %v239, %v249
      %v253 = vsub.f32 %v240, %v249
      %v254 = vmul.f32 %v250, 1.442695
      %v255 = vpow.pop %v254
      %v256 = vmul.f32 %v251, 1.442695
      %v257 = vpow.pop %v256
      %v258 = vmul.f32 %v252, 1.442695
      %v259 = vpow.pop %v258
      %v260 = vmul.f32 %v253, 1.442695
      %v261 = vpow.pop %v260
      %v262 = vsel %vm242, %v255, 0.0
      %v263 = vsel %vm242, %v257, 0.0
      %v264 = vadd.f32 %v262, %v263
      %v265 = vsel %vm242, %v259, 0.0
      %v266 = vadd.f32 %v264, %v265
      %v267 = vsel %vm242, %v261, 0.0
      %v268 = vadd.f32 %v266, %v267
      %v269 = vrcp.pop %v268
      %v270 = vmul.f32 %v255, %v269
      %vm271 = vcmp.eq.s32.totalorder %v241, 0
      %v272 = vsel %vm271, 1, 0
      %v273 = vcvt.s32.f32 %v272
      %v274 = vmul.f32 %v270, %v273
      %v275 = vsel %vm242, %v274, 0.0
      %v276 = vrot.slane %v275, 4
      %v277 = vadd.f32 %v275, %v276
      %v278 = vrot.slane %v277, 2
      %v279 = vadd.f32 %v277, %v278
      %v280 = vrot.slane %v279, 1
      %v281 = vadd.f32 %v279, %v280
      %v282 = vadd.f32 %v270, %v273
      %v283 = vsel %vm242, %v282, 0.0
      %v284 = vrot.slane %v283, 4
      %v285 = vadd.f32 %v283, %v284
      %v286 = vrot.slane %v285, 2
      %v287 = vadd.f32 %v285, %v286
      %v288 = vrot.slane %v287, 1
      %v289 = vadd.f32 %v287, %v288
      %v290 = vmul.f32 %v257, %v269
      %vm291 = vcmp.eq.s32.totalorder %v241, 1
      %v292 = vsel %vm291, 1, 0
      %v293 = vcvt.s32.f32 %v292
      %v294 = vmul.f32 %v290, %v293
      %v295 = vsel %vm242, %v294, 0.0
      %v296 = vrot.slane %v295, 4
      %v297 = vadd.f32 %v295, %v296
      %v298 = vrot.slane %v297, 2
      %v299 = vadd.f32 %v297, %v298
      %v300 = vrot.slane %v299, 1
      %v301 = vadd.f32 %v299, %v300
      %v302 = vadd.f32 %v290, %v293
      %v303 = vsel %vm242, %v302, 0.0
      %v304 = vrot.slane %v303, 4
      %v305 = vadd.f32 %v303, %v304
      %v306 = vrot.slane %v305, 2
      %v307 = vadd.f32 %v305, %v306
      %v308 = vrot.slane %v307, 1
      %v309 = vadd.f32 %v307, %v308
      %v310 = vmul.f32 %v259, %v269
      %vm311 = vcmp.eq.s32.totalorder %v241, 2
      %v312 = vsel %vm311, 1, 0
      %v313 = vcvt.s32.f32 %v312
      %v314 = vmul.f32 %v310, %v313
      %v315 = vsel %vm242, %v314, 0.0
      %v316 = vrot.slane %v315, 4
      %v317 = vadd.f32 %v315, %v316
      %v318 = vrot.slane %v317, 2
      %v319 = vadd.f32 %v317, %v318
      %v320 = vrot.slane %v319, 1
      %v321 = vadd.f32 %v319, %v320
      %v322 = vadd.f32 %v310, %v313
      %v323 = vsel %vm242, %v322, 0.0
      %v324 = vrot.slane %v323, 4
      %v325 = vadd.f32 %v323, %v324
      %v326 = vrot.slane %v325, 2
      %v327 = vadd.f32 %v325, %v326
      %v328 = vrot.slane %v327, 1
      %v329 = vadd.f32 %v327, %v328
      %v330 = vmul.f32 %v261, %v269
      %vm331 = vcmp.eq.s32.totalorder %v241, 3
      %v332 = vsel %vm331, 1, 0
      %v333 = vcvt.s32.f32 %v332
      %v334 = vmul.f32 %v330, %v333
      %v335 = vsel %vm242, %v334, 0.0
      %v336 = vrot.slane %v335, 4
      %v337 = vadd.f32 %v335, %v336
      %v338 = vrot.slane %v337, 2
      %v339 = vadd.f32 %v337, %v338
      %v340 = vrot.slane %v339, 1
      %v341 = vadd.f32 %v339, %v340
      %v342 = vadd.f32 %v330, %v333
      %v343 = vsel %vm242, %v342, 0.0
      %v344 = vrot.slane %v343, 4
      %v345 = vadd.f32 %v343, %v344
      %v346 = vrot.slane %v345, 2
      %v347 = vadd.f32 %v345, %v346
      %v348 = vrot.slane %v347, 1
      %v349 = vadd.f32 %v347, %v348
      %v350 = vld [vmem:[%s226] sm:$0xf]
      %vm351 = vcmask 1040384
      %v352 = vsel %vm351, %v281, %v301
      %v353 = vsel %vm242, %v352, %v321
      %vm354 = vcmask 1042432
      %v355 = vsel %vm354, %v353, %v341
      %v356 = vadd.f32 %v350, %v355
      %357 = vst [vmem:[%s226] sm:$0xf] %v356
      %v358 = vld [vmem:[%s230] sm:$0xf]
      %v359 = vsel %vm351, %v289, %v309
      %v360 = vsel %vm242, %v359, %v329
      %v361 = vsel %vm354, %v360, %v349
      %v362 = vadd.f32 %v358, %v361
      %363 = vst [vmem:[%s230] sm:$0xf] %v362
      %p364 = scmp.lt.s32.totalorder %s19, 1
      %s365 = scalar_select %p364, %s19, 1
      %s366 = smul.addr %s365, 4
      %s367 = scalar_lea.vmem %s2, %s366
      %p368 = scmp.lt.s32.totalorder %s19, 1
      %s369 = scalar_select %p368, %s19, 1
      %s370 = smul.addr %s369, 4
      %s371 = scalar_lea.vmem %s3, %s370
      // Predicated region
      $region33: #{dice_log_cosh.1} parent=27 // pred_check
        %p372 = pneg %p101
      $region34: #{dice_log_cosh.1} parent=27 // pred_check_branch
        %374 = sbr.rel (%p372) target = $region36
      $region35: #{dice_log_cosh.1} parent=27 // pred_region
        _
      $region36: #{dice_log_cosh.1} parent=27 // pred_fallthru
        _
      // Predicated region
      $region37: #{dice_log_cosh.1} parent=27 // pred_check
        %p375 = pneg %p127
      $region38: #{dice_log_cosh.1} parent=27 // pred_check_branch
        %377 = sbr.rel (%p375) target = $region40
      $region39: #{dice_log_cosh.1} parent=27 // pred_region
        _
      $region40: #{dice_log_cosh.1} parent=27 // pred_fallthru
        _
    $region28: #{dice_log_cosh.1} parent=5 // pred_fallthru
      _
    %p378 = scmp.le.s32.totalorder 2, %s10
    // Predicated region
    $region41: #{dice_log_cosh.1} parent=5 // pred_check
      %p379 = pneg %p378
    $region42: #{dice_log_cosh.1} parent=5 // pred_check_branch
      %381 = sbr.rel (%p379) target = $region44
    $region43: #{dice_log_cosh.1} parent=5 // pred_region
      %s382 = ssub.s32 %s10, 2
      // Predicated region
      $region45: #{dice_log_cosh.1} parent=43 // pred_check
        %p383 = pneg %p107
      $region46: #{dice_log_cosh.1} parent=43 // pred_check_branch
        %385 = sbr.rel (%p383) target = $region48
      $region47: #{dice_log_cosh.1} parent=43 // pred_region
        %p386 = scmp.lt.s32.totalorder %s21, 1
        %s387 = scalar_select %p386, %s21, 1
        %s388 = smul.addr %s387, 4
        %s389 = scalar_lea.vmem %s2, %s388
      $region48: #{dice_log_cosh.1} parent=43 // pred_fallthru
        _
      // Predicated region
      $region49: #{dice_log_cosh.1} parent=43 // pred_check
        %p390 = pneg %p133
      $region50: #{dice_log_cosh.1} parent=43 // pred_check_branch
        %392 = sbr.rel (%p390) target = $region52
      $region51: #{dice_log_cosh.1} parent=43 // pred_region
        %p393 = scmp.lt.s32.totalorder %s21, 1
        %s394 = scalar_select %p393, %s21, 1
        %s395 = smul.addr %s394, 4
        %s396 = scalar_lea.vmem %s3, %s395
      $region52: #{dice_log_cosh.1} parent=43 // pred_fallthru
        _
    $region44: #{dice_log_cosh.1} parent=5 // pred_fallthru
      _
  $region6: #{dice_log_cosh.1} parent=0 // loop_footer
    %s14 = sadd.s32 1, %s10
  $region7: #{dice_log_cosh.1} parent=0 // loop_footer_branch
    %9 = sbr.rel target = $region3
  $region8: #{dice_log_cosh.1} parent=0 // loop_exit
    _

</llo_original>
